<compile_context>
chip_gen: v5e
topology: v5e:2x2
jax: 0.10.0
libtpu: 0.0.40
codegen_flags: <defaults>
</compile_context>

<pallas_src>
import functools

import jax
import jax.numpy as jnp
from jax.experimental import pallas as pl
from jax.experimental.pallas import tpu as pltpu

LANES = 128


def _sublane_multiple(dtype) -> int:
    """Native second-minor tiling multiple for a dtype (8/16/32)."""
    return {4: 8, 2: 16, 1: 32}.get(jnp.dtype(dtype).itemsize, 8)


def _mse_sum_kernel(a_ref, b_ref, o_ref, acc_ref, *, last_valid_rows, inv_n):
    """Stream (tile_rows, 128) blocks, accumulate sum((a-b)^2) into an (8,128)
    f32 VMEM slab, and on the last step write sum * (1/N) as a (1,1) scalar."""
    i = pl.program_id(0)
    last = pl.num_programs(0) - 1

    @pl.when(i == 0)
    def _init():
        acc_ref[...] = jnp.zeros_like(acc_ref)

    d = a_ref[...].astype(jnp.float32) - b_ref[...].astype(jnp.float32)
    sq = d * d
    tile_rows = sq.shape[0]  # static, multiple of 8

    def _accum(vals):
        # (tile_rows,128) -> (tile_rows//8, 8, 128); reduce the leading axis.
        # Never crosses an (8,128) f32 tile boundary -> whole-vreg VPU adds.
        acc_ref[...] += jnp.sum(vals.reshape(tile_rows // 8, 8, LANES), axis=0)

    if last_valid_rows is None:
        # rows % tile_rows == 0: every block is fully valid.
        _accum(sq)
    else:
        # cdiv grid: the last block has only `last_valid_rows` valid rows; the
        # rest of the VMEM buffer is stale garbage and must be masked out.
        @pl.when(i != last)
        def _full():
            _accum(sq)

        @pl.when(i == last)
        def _ragged():
            rid = jax.lax.broadcasted_iota(jnp.int32, sq.shape, 0)
            _accum(jnp.where(rid < last_valid_rows, sq, jnp.float32(0.0)))

    @pl.when(i == last)
    def _finalize():
        s = jnp.sum(acc_ref[...], axis=1, keepdims=True)  # (8,1)  cross-lane
        s = jnp.sum(s, axis=0, keepdims=True)             # (1,1)  cross-sublane
        o_ref[...] = s * jnp.float32(inv_n)


def depth_loss(depth, depth_init, *, max_tile_rows=4096):
    """MSE loss (mean reduction). Equivalent to torch.nn.MSELoss()(depth, depth_init)."""
    assert depth.shape == depth_init.shape, "shape mismatch"
    n = int(depth.size)
    if n == 0:
        return jnp.float32(jnp.nan)  # torch.nn.MSELoss on empty input -> nan

    ctype = jnp.promote_types(depth.dtype, depth_init.dtype)
    a = depth.reshape(-1)
    b = depth_init.reshape(-1)
    if a.dtype != ctype:
        a = a.astype(ctype)
    if b.dtype != ctype:
        b = b.astype(ctype)

    sub = _sublane_multiple(ctype)
    chunk = sub * LANES                    # one native tile of this dtype
    main_len = (n // chunk) * chunk        # aligned prefix streamed by the kernel
    inv_n = 1.0 / float(n)

    # Tail (< chunk elements): tiny plain-XLA reduce, exact (same f32 math).
    tail = None
    if main_len < n:
        ta = a[main_len:].astype(jnp.float32)
        tb = b[main_len:].astype(jnp.float32)
        dt = ta - tb
        tail = jnp.sum(dt * dt) * jnp.float32(inv_n)

    if main_len == 0:
        return tail

    rows = main_len // LANES               # multiple of `sub` (>= 8)
    a2 = a[:main_len].reshape(rows, LANES)  # bitcast when main_len == n
    b2 = b[:main_len].reshape(rows, LANES)

    # Fixed large tile (multiple of the dtype's sublane count); ragged last
    # block handled by in-kernel masking instead of shrinking the tile.
    tile_rows = min(rows, max((max_tile_rows // sub) * sub, sub))
    num_tiles = -(-rows // tile_rows)      # cdiv
    rem_rows = rows - (num_tiles - 1) * tile_rows
    last_valid_rows = None if rem_rows == tile_rows else rem_rows

    kernel = functools.partial(
        _mse_sum_kernel, last_valid_rows=last_valid_rows, inv_n=inv_n)

    main = pl.pallas_call(
        kernel,
        out_shape=jax.ShapeDtypeStruct((1, 1), jnp.float32),
        grid_spec=pltpu.PrefetchScalarGridSpec(
            num_scalar_prefetch=0,
            grid=(num_tiles,),
            in_specs=[
                pl.BlockSpec((tile_rows, LANES), lambda i: (i, 0)),
                pl.BlockSpec((tile_rows, LANES), lambda i: (i, 0)),
            ],
            out_specs=pl.BlockSpec((1, 1), lambda i: (0, 0)),
            scratch_shapes=[pltpu.VMEM((8, LANES), jnp.float32)],
        ),
        compiler_params=pltpu.CompilerParams(
            dimension_semantics=("arbitrary",),
            vmem_limit_bytes=32 * 1024 * 1024,
        ),
    )(a2, b2)

    loss = main[0, 0]
    if tail is not None:
        loss = loss + tail
    return loss


if __name__ == "__main__":
    key = jax.random.PRNGKey(0)
    k1, k2, k3 = jax.random.split(key, 3)

    # Small depth-map-like shapes: N=2, C=4, H=16, W=16 (NCHW) -> 2048 elems.
    shape = (2, 4, 16, 16)
    depth = jax.random.normal(k1, shape, dtype=jnp.float32)
    depth_init = jax.random.normal(k2, shape, dtype=jnp.float32)
    # `mask` is part of the PyTorch __init__ but unused in forward().
    mask = jax.random.uniform(k3, shape[2:]) > 0.5
    _ = mask  # self.imask equivalent (unused by forward)

    ref = jnp.mean((depth - depth_init) ** 2)

    # 1) Aligned fast path: no pad / no copy, single block, fused finalize.
    loss = depth_loss(depth, depth_init)
    jax.block_until_ready(loss)
    assert jnp.allclose(loss, ref, rtol=1e-5, atol=1e-6), (loss, ref)

    # 2) Multi-tile cdiv grid with a ragged (masked) last block + XLA tail:
    #    3125 elems -> 3072 aligned (24 rows; tiles of 16 + ragged 8) + 53 tail.
    shape2 = (5, 5, 5, 25)
    d2 = jax.random.normal(k1, shape2, dtype=jnp.float32)
    d2i = jax.random.normal(k2, shape2, dtype=jnp.float32)
    ref2 = jnp.mean((d2 - d2i) ** 2)
    loss2 = depth_loss(d2, d2i, max_tile_rows=16)
    jax.block_until_ready(loss2)
    assert jnp.allclose(loss2, ref2, rtol=1e-5, atol=1e-6), (loss2, ref2)

    # 3) Native-dtype streaming path (bf16 inputs, f32 in-kernel accumulation).
    db = depth.astype(jnp.bfloat16)
    dbi = depth_init.astype(jnp.bfloat16)
    ref3 = jnp.mean((db.astype(jnp.float32) - dbi.astype(jnp.float32)) ** 2)
    loss3 = depth_loss(db, dbi)
    jax.block_until_ready(loss3)
    assert jnp.allclose(loss3, ref3, rtol=1e-4, atol=1e-5), (loss3, ref3)

    print("KERNEL_OK")
</pallas_src>

<mosaic_0001>
module attributes {stable_mosaic.version = 11 : i64} {
  func.func @_mse_sum_kernel(%arg0: i32, %arg1: memref<16x128xf32, #tpu.memory_space<vmem>>, %arg2: memref<16x128xf32, #tpu.memory_space<vmem>>, %arg3: memref<1x1xf32, #tpu.memory_space<vmem>>, %arg4: memref<8x128xf32, #tpu.memory_space<vmem>>) attributes {dimension_semantics = [#tpu.dimension_semantics<arbitrary>], iteration_bounds = array<i64: 1>, scalar_prefetch = 0 : i64, scratch_operands = 1 : i64, tpu.core_type = #tpu.core_type<tc>, window_params = [{transform_indices = @transform_0, window_bounds = array<i64: 16, 128>}, {transform_indices = @transform_1, window_bounds = array<i64: 16, 128>}, {pipeline_mode = #tpu.pipeline_mode<synchronous>, transform_indices = @transform_2, window_bounds = array<i64: 1, 1>}]} {
    %c0_i32 = arith.constant 0 : i32
    %0 = arith.cmpi eq, %arg0, %c0_i32 : i32
    %1 = arith.extui %0 : i1 to i32
    %c0_i32_0 = arith.constant 0 : i32
    %2 = arith.cmpi ne, %1, %c0_i32_0 : i32
    scf.if %2 {
      %cst_10 = arith.constant 0.000000e+00 : f32
      %15 = vector.broadcast %cst_10 : f32 to vector<8x128xf32>
      %c0_11 = arith.constant 0 : index
      %c0_12 = arith.constant 0 : index
      %16 = vector.load %arg4[%c0_11, %c0_12] : memref<8x128xf32, #tpu.memory_space<vmem>>, vector<8x128xf32>
      tpu.vector_store %arg4[%c0_11, %c0_12], %15 {strides = array<i32>} : memref<8x128xf32, #tpu.memory_space<vmem>>, vector<8x128xf32>,
    } else {
    }
    %c0 = arith.constant 0 : index
    %c0_1 = arith.constant 0 : index
    %3 = vector.load %arg1[%c0, %c0_1] : memref<16x128xf32, #tpu.memory_space<vmem>>, vector<16x128xf32>
    %c0_2 = arith.constant 0 : index
    %c0_3 = arith.constant 0 : index
    %4 = vector.load %arg2[%c0_2, %c0_3] : memref<16x128xf32, #tpu.memory_space<vmem>>, vector<16x128xf32>
    %5 = arith.subf %3, %4 : vector<16x128xf32>
    %6 = arith.mulf %5, %5 : vector<16x128xf32>
    %c0_4 = arith.constant 0 : index
    %c0_5 = arith.constant 0 : index
    %7 = vector.load %arg4[%c0_4, %c0_5] : memref<8x128xf32, #tpu.memory_space<vmem>>, vector<8x128xf32>
    %8 = vector.shape_cast %6 : vector<16x128xf32> to vector<2x8x128xf32>
    %cst = arith.constant dense<0.000000e+00> : vector<8x128xf32>
    %9 = vector.multi_reduction <add>, %8, %cst [0] : vector<2x8x128xf32> to vector<8x128xf32>
    %10 = arith.addf %7, %9 : vector<8x128xf32>
    %c0_6 = arith.constant 0 : index
    %c0_7 = arith.constant 0 : index
    %11 = vector.load %arg4[%c0_6, %c0_7] : memref<8x128xf32, #tpu.memory_space<vmem>>, vector<8x128xf32>
    tpu.vector_store %arg4[%c0_6, %c0_7], %10 {strides = array<i32>} : memref<8x128xf32, #tpu.memory_space<vmem>>, vector<8x128xf32>,
    %c0_i32_8 = arith.constant 0 : i32
    %12 = arith.cmpi eq, %arg0, %c0_i32_8 : i32
    %13 = arith.extui %12 : i1 to i32
    %c0_i32_9 = arith.constant 0 : i32
    %14 = arith.cmpi ne, %13, %c0_i32_9 : i32
    scf.if %14 {
      %c0_10 = arith.constant 0 : index
      %c0_11 = arith.constant 0 : index
      %15 = vector.load %arg4[%c0_10, %c0_11] : memref<8x128xf32, #tpu.memory_space<vmem>>, vector<8x128xf32>
      %cst_12 = arith.constant dense<0.000000e+00> : vector<8xf32>
      %16 = vector.multi_reduction <add>, %15, %cst_12 [1] : vector<8x128xf32> to vector<8xf32>
      %17 = vector.shape_cast %16 : vector<8xf32> to vector<8x1xf32>
      %cst_13 = arith.constant dense<0.000000e+00> : vector<1xf32>
      %18 = vector.multi_reduction <add>, %17, %cst_13 [0] : vector<8x1xf32> to vector<1xf32>
      %19 = vector.shape_cast %18 : vector<1xf32> to vector<1x1xf32>
      %cst_14 = arith.constant 4.8828125E-4 : f32
      %20 = vector.broadcast %cst_14 : f32 to vector<1x1xf32>
      %21 = arith.mulf %19, %20 : vector<1x1xf32>
      %c0_15 = arith.constant 0 : index
      %c0_16 = arith.constant 0 : index
      %22 = vector.load %arg3[%c0_15, %c0_16] : memref<1x1xf32, #tpu.memory_space<vmem>>, vector<1x1xf32>
      tpu.vector_store %arg3[%c0_15, %c0_16], %21 {strides = array<i32>} : memref<1x1xf32, #tpu.memory_space<vmem>>, vector<1x1xf32>,
    } else {
    }
    return
  }
  func.func @transform_0(%arg0: i32) -> (i32, i32) {
    %c0_i32 = arith.constant 0 : i32
    %c0_i32_0 = arith.constant 0 : i32
    return %arg0, %c0_i32 : i32, i32
  }
  func.func @transform_1(%arg0: i32) -> (i32, i32) {
    %c0_i32 = arith.constant 0 : i32
    %c0_i32_0 = arith.constant 0 : i32
    return %arg0, %c0_i32 : i32, i32
  }
  func.func @transform_2(%arg0: i32) -> (i32, i32) {
    %c0_i32 = arith.constant 0 : i32
    %c0_i32_0 = arith.constant 0 : i32
    %c0_i32_1 = arith.constant 0 : i32
    return %c0_i32, %c0_i32_0 : i32, i32
  }
}

</mosaic_0001>

<llo_original>
// kernel: tpu_custom_call.1
$region0: #{tpu_custom_call.1}
  #allocation0 [shape = 'u32[]', space=smem, size = 0x4, offset = 0x4, fixed_abs, tag = 'smem constant byte address 0x4 - core index']
  #allocation1 [shape = 'u32[72,128]{1,0:T(1,128)}', space=vmem, size = 0x9000, scoped, tag = 'internal scratch']
  #allocation2 [shape = 'f32[8,128]{1,0:T(8,128)}', space=vmem, size = 0x1000, scoped, tag = 'scratch operand']
  %s0 = inlined_call_operand.hbm [shape: f32[16,128], index: 0, kind: input, shape index: {}]
  %s1 = inlined_call_operand.hbm [shape: f32[16,128], index: 1, kind: input, shape index: {}]
  %s2 = inlined_call_operand.hbm [shape: f32[1,1], index: 2, kind: output, shape index: {}]
  %s3 = sld [smem:[#allocation0]]
  $region34: #{tpu_custom_call.1} parent=0
    _
  %s5 = ssub.s32 1, %s3
  %s6 = scalar_select 0, %s5, %s3
  $region1: #{tpu_custom_call.1} parent=0
    #allocation3 [shape = 'u8[8192]{0}', space=vmem, size = 0x2000, scoped, tag = 'input window, operand 0, single buffered']
    #allocation4 [shape = 's32[1]{0}', space=sflag, size = 0x4, scoped, tag = 'scoped memory for tpu_custom_call.1']
    #allocation5 [shape = 's32[1]{0}', space=sflag, size = 0x4, scoped, tag = 'scoped memory for tpu_custom_call.1']
    #allocation6 [shape = 'u8[8192]{0}', space=vmem, size = 0x2000, scoped, tag = 'input window, operand 1, single buffered']
    #allocation7 [shape = 's32[1]{0}', space=sflag, size = 0x4, scoped, tag = 'scoped memory for tpu_custom_call.1']
    #allocation8 [shape = 'u8[512]{0}', space=vmem, size = 0x400, scoped, tag = 'output window, operand 0, single buffered']
    %7 = vsyncpa [#allocation4], 0
    %8 = vsyncpa [#allocation7], 0
    %9 = vsyncpa [#allocation5], 0
    // Predicated region
    $region2: #{tpu_custom_call.1} parent=1 // pred_check
      _
    $region3: #{tpu_custom_call.1} parent=1 // pred_check_branch
      %11 = sbr.rel (0) target = $region5
    $region4: #{tpu_custom_call.1} parent=1 // pred_region
      %13 = vsyncadd [#allocation4], 0
      %s14 = sshll.u32 %s0, 4
      %s15 = int_to_ptr.hbm [resolvable:$true] %s14
      %s16 = sshll.u32 [#allocation3], 4
      %s17 = int_to_ptr.vmem [resolvable:$true] %s16
      %22 = dma.hbm_to_vmem [thread:$0]  %s15, 256, %s17, [#allocation4], 128, 128, 8
    $region5: #{tpu_custom_call.1} parent=1 // pred_fallthru
      _
    // Predicated region
    $region6: #{tpu_custom_call.1} parent=1 // pred_check
      _
    $region7: #{tpu_custom_call.1} parent=1 // pred_check_branch
      %24 = sbr.rel (0) target = $region9
    $region8: #{tpu_custom_call.1} parent=1 // pred_region
      %26 = vsyncadd [#allocation7], 0
      %s27 = sshll.u32 %s1, 4
      %s28 = int_to_ptr.hbm [resolvable:$true] %s27
      %s29 = sshll.u32 [#allocation6], 4
      %s30 = int_to_ptr.vmem [resolvable:$true] %s29
      %35 = dma.hbm_to_vmem [thread:$0]  %s28, 256, %s30, [#allocation7], 128, 128, 8
    $region9: #{tpu_custom_call.1} parent=1 // pred_fallthru
      _
    // Predicated region
    $region10: #{tpu_custom_call.1} parent=1 // pred_check
      _
    $region11: #{tpu_custom_call.1} parent=1 // pred_check_branch
      %37 = sbr.rel (0) target = $region13
    $region12: #{tpu_custom_call.1} parent=1 // pred_region
      %39 = dma.done [#allocation4], 256
    $region13: #{tpu_custom_call.1} parent=1 // pred_fallthru
      _
    // Predicated region
    $region14: #{tpu_custom_call.1} parent=1 // pred_check
      _
    $region15: #{tpu_custom_call.1} parent=1 // pred_check_branch
      %41 = sbr.rel (0) target = $region17
    $region16: #{tpu_custom_call.1} parent=1 // pred_region
      %43 = dma.done [#allocation7], 256
    $region17: #{tpu_custom_call.1} parent=1 // pred_fallthru
      _
    %p44 = scmp.eq.s32.totalorder 0, 0
    // Predicated region
    $region18: #{tpu_custom_call.1} parent=1 // pred_check
      %p45 = pneg %p44
    $region19: #{tpu_custom_call.1} parent=1 // pred_check_branch
      %47 = sbr.rel (%p45) target = $region21
    $region20: #{tpu_custom_call.1} parent=1 // pred_region
      %48 = vst [vmem:[#allocation2] sm:$0xff] 0.0
    $region21: #{tpu_custom_call.1} parent=1 // pred_fallthru
      _
    %v49 = vld [vmem:[#allocation3] sm:$0xff]
    %v50 = vld [vmem:[#allocation3 + $0x8] sm:$0xff]
    %v51 = vld [vmem:[#allocation6] sm:$0xff]
    %v52 = vld [vmem:[#allocation6 + $0x8] sm:$0xff]
    %v53 = vsub.f32 %v49, %v51
    %v54 = vsub.f32 %v50, %v52
    %v55 = vmul.f32 %v53, %v53
    %v56 = vmul.f32 %v54, %v54
    %v57 = vld [vmem:[#allocation2] sm:$0xff]
    %v58 = vadd.f32 %v55, %v56
    %v59 = vadd.f32 %v57, %v58
    %60 = vst [vmem:[#allocation2] sm:$0xff] %v59
    // Predicated region
    $region22: #{tpu_custom_call.1} parent=1 // pred_check
      %p61 = pneg %p44
    $region23: #{tpu_custom_call.1} parent=1 // pred_check_branch
      %63 = sbr.rel (%p61) target = $region25
    $region24: #{tpu_custom_call.1} parent=1 // pred_region
      %v64 = vld [vmem:[#allocation2] sm:$0xff]
      %65 = vadd.xlane.f32.xlu0 %v64
      %v66 = vpop.xlane.xlu0 %65
      %v67 = vrot.slane %v66, 4
      %v68 = vadd.f32 %v66, %v67
      %v69 = vrot.slane %v68, 2
      %v70 = vadd.f32 %v68, %v69
      %v71 = vrot.slane %v70, 1
      %v72 = vadd.f32 %v70, %v71
      %v73 = vmul.f32 %v72, 0.00048828125
      %vm74 = vcmask 0
      %75 = vst.msk [vmem:[#allocation8] sm:$0x1] %vm74, %v73
    $region25: #{tpu_custom_call.1} parent=1 // pred_fallthru
      _
    // Predicated region
    $region26: #{tpu_custom_call.1} parent=1 // pred_check
      _
    $region27: #{tpu_custom_call.1} parent=1 // pred_check_branch
      %77 = sbr.rel (0) target = $region29
    $region28: #{tpu_custom_call.1} parent=1 // pred_region
      %79 = vsyncadd [#allocation5], 0
      %s81 = sshll.u32 [#allocation8], 4
      %s82 = int_to_ptr.vmem [resolvable:$true] %s81
      %s83 = sshll.u32 %s2, 4
      %s84 = int_to_ptr.hbm [resolvable:$true] %s83
      %86 = dma.vmem_to_hbm [thread:$0]  %s82, 16, %s84, [#allocation5]
    $region29: #{tpu_custom_call.1} parent=1 // pred_fallthru
      _
    // Predicated region
    $region30: #{tpu_custom_call.1} parent=1 // pred_check
      _
    $region31: #{tpu_custom_call.1} parent=1 // pred_check_branch
      %88 = sbr.rel (0) target = $region33
    $region32: #{tpu_custom_call.1} parent=1 // pred_region
      %90 = dma.done [#allocation5], 16
    $region33: #{tpu_custom_call.1} parent=1 // pred_fallthru
      _
    %91 = vsyncpa [#allocation4], 1
    %92 = vsyncpa [#allocation7], 1
    %93 = vsyncpa [#allocation5], 1

</llo_original>
